<compile_context>
chip_gen: v7x
topology: tpu7x:2x2x1
jax: 0.10.0
libtpu: 0.0.40
codegen_flags: <defaults>
</compile_context>

<pallas_src>
import jax
import jax.numpy as jnp
from jax.experimental import pallas as pl
from jax.experimental.pallas import tpu as pltpu

# Problem sizes implied by the module (Net feeds (B, 75, 7, 6) into PolicyHead(75, 84, 2)).
B, INP, H, W = 2, 75, 7, 6
HW = H * W                  # 42
CONV_OUT = 2                # PolicyHead.conv has 2 output channels
HIDDEN = CONV_OUT * HW      # 84  (flatten size inside PolicyHead)
OUT = 2                     # PolicyHead.lin1 output features
FLAT = INP * HW             # 3150 (composed input feature size)
FLAT_PAD = 3200             # K rounded up to a multiple of 128 lanes


def policy_head_kernel(x_ref, w_ref, b_ref, o_ref):
    # x_ref: (B, FLAT_PAD)   zero-padded, channel-major flattened input
    # w_ref: (OUT, FLAT_PAD) lane-major composed conv+linear weight (zero-padded on K)
    # b_ref: (1, OUT)        composed bias
    # o_ref: (B, OUT)        softmax output
    x = x_ref[...]
    w = w_ref[...]

    # Exact-f32 VPU contraction (elementwise multiply + cross-lane reduce).
    # logits[b, o] = sum_k x[b, k] * w[o, k] + b[o]
    logits = jnp.sum(x[:, None, :] * w[None, :, :], axis=-1) + b_ref[...]   # (B, OUT)

    # Softmax over the feature axis (nn.Softmax() on 2-D input -> dim=1); exact divide.
    m = jnp.max(logits, axis=-1, keepdims=True)
    e = jnp.exp(logits - m)
    o_ref[...] = e / jnp.sum(e, axis=-1, keepdims=True)


def compose_policy_head_params(wc, bc, wl, bl):
    """One-time composition of the 1x1 conv + linear into one affine map.

    Call this when parameters are created (NOT per forward call).

    Returns:
      w_t   : (OUT, FLAT_PAD) f32, lane-major composed weight, zero-padded on K.
              w_t[o, i*HW + s] = sum_c wc[c, i] * wl[o, c*HW + s]
      b_eff : (1, OUT) f32 composed bias.
              b_eff[o] = sum_{c,s} wl[o, c*HW + s] * bc[c] + bl[o]
    """
    hp = jax.lax.Precision.HIGHEST
    wc2 = wc.reshape(CONV_OUT, INP).astype(jnp.float32)                     # (2, 75)
    wl3 = wl.reshape(OUT, CONV_OUT, HW).astype(jnp.float32)                 # (2, 2, 42)
    w_t = jnp.einsum('ci,ocs->ois', wc2, wl3, precision=hp).reshape(OUT, FLAT)
    w_t = jnp.pad(w_t, ((0, 0), (0, FLAT_PAD - FLAT)))                      # (2, 3200)
    b_eff = (jnp.einsum('ocs,c->o', wl3, bc.astype(jnp.float32), precision=hp)
             + bl.astype(jnp.float32)).reshape(1, OUT)
    return w_t, b_eff


@jax.jit
def policy_head(x_nchw, w_t, b_eff):
    """x_nchw: (B, INP, H, W) f32; (w_t, b_eff) from compose_policy_head_params.

    Returns (B, OUT) f32 softmax probabilities.
    """
    # NCHW reshape is channel-major: flat index i*HW + h*W + w.
    x_flat = x_nchw.reshape(B, FLAT).astype(jnp.float32)                    # (B, 3150)
    # Zero-pad K so the lane axis is a multiple of 128 (padded weight columns are 0,
    # so the extra products contribute nothing).
    x_pad = jnp.pad(x_flat, ((0, 0), (0, FLAT_PAD - FLAT)))                 # (B, 3200)

    return pl.pallas_call(
        policy_head_kernel,
        out_shape=jax.ShapeDtypeStruct((B, OUT), jnp.float32),
        in_specs=[
            pl.BlockSpec(memory_space=pltpu.MemorySpace.VMEM),  # x_pad (whole array)
            pl.BlockSpec(memory_space=pltpu.MemorySpace.VMEM),  # w_t
            pl.BlockSpec(memory_space=pltpu.MemorySpace.VMEM),  # b_eff
        ],
        out_specs=pl.BlockSpec(memory_space=pltpu.MemorySpace.VMEM),
    )(x_pad, w_t, b_eff)


def policy_head_ref(x_nchw, wc, bc, wl, bl):
    """Pure-JAX reference mirroring the PyTorch forward exactly (no composition)."""
    hp = jax.lax.Precision.HIGHEST
    x = x_nchw.astype(jnp.float32)
    conv = jnp.einsum('oc,bchw->bohw', wc.reshape(CONV_OUT, INP), x, precision=hp) \
        + bc.reshape(1, CONV_OUT, 1, 1)
    flat = conv.reshape(B, HIDDEN)                         # channel-major flatten
    logits = jnp.dot(flat, wl.T, precision=hp) + bl
    return jax.nn.softmax(logits, axis=1)


if __name__ == "__main__":
    key = jax.random.PRNGKey(0)
    kx, k1, k2, k3, k4 = jax.random.split(key, 5)

    # Deterministic synthetic parameters (shapes from PolicyHead.__init__(75, 84, 2)).
    x = jax.random.normal(kx, (B, INP, H, W), dtype=jnp.float32)
    wc = jax.random.normal(k1, (CONV_OUT, INP), dtype=jnp.float32) * 0.1   # Conv2d(75, 2, 1) weight (squeezed 1x1)
    bc = jax.random.normal(k2, (CONV_OUT,), dtype=jnp.float32) * 0.1       # Conv2d bias
    wl = jax.random.normal(k3, (OUT, HIDDEN), dtype=jnp.float32) * 0.1     # Linear(84, 2) weight
    bl = jax.random.normal(k4, (OUT,), dtype=jnp.float32) * 0.1            # Linear bias

    # Compose conv+linear once, outside the per-call path.
    w_t, b_eff = compose_policy_head_params(wc, bc, wl, bl)
    w_t, b_eff = jax.block_until_ready((w_t, b_eff))

    out = policy_head(x, w_t, b_eff)
    out = jax.block_until_ready(out)

    ref = policy_head_ref(x, wc, bc, wl, bl)
    assert out.shape == (B, OUT)
    assert jnp.allclose(out, ref, atol=1e-5, rtol=1e-5)

    print("KERNEL_OK")
</pallas_src>

<mosaic_0001>
module attributes {stable_mosaic.version = 11 : i64} {
  func.func @policy_head_kernel(%arg0: memref<2x3200xf32, #tpu.memory_space<vmem>>, %arg1: memref<2x3200xf32, #tpu.memory_space<vmem>>, %arg2: memref<1x2xf32, #tpu.memory_space<vmem>>, %arg3: memref<2x2xf32, #tpu.memory_space<vmem>>) attributes {dimension_semantics = [], scalar_prefetch = 0 : i64, scratch_operands = 0 : i64, tpu.core_type = #tpu.core_type<tc>} {
    %c0 = arith.constant 0 : index
    %c0_0 = arith.constant 0 : index
    %0 = vector.load %arg0[%c0, %c0_0] : memref<2x3200xf32, #tpu.memory_space<vmem>>, vector<2x3200xf32>
    %c0_1 = arith.constant 0 : index
    %c0_2 = arith.constant 0 : index
    %1 = vector.load %arg1[%c0_1, %c0_2] : memref<2x3200xf32, #tpu.memory_space<vmem>>, vector<2x3200xf32>
    %2 = vector.shape_cast %0 : vector<2x3200xf32> to vector<2x1x3200xf32>
    %3 = vector.shape_cast %1 : vector<2x3200xf32> to vector<1x2x3200xf32>
    %4 = vector.broadcast %2 : vector<2x1x3200xf32> to vector<2x2x3200xf32>
    %5 = vector.broadcast %3 : vector<1x2x3200xf32> to vector<2x2x3200xf32>
    %6 = arith.mulf %4, %5 : vector<2x2x3200xf32>
    %cst = arith.constant dense<0.000000e+00> : vector<2x2xf32>
    %7 = vector.multi_reduction <add>, %6, %cst [2] : vector<2x2x3200xf32> to vector<2x2xf32>
    %c0_3 = arith.constant 0 : index
    %c0_4 = arith.constant 0 : index
    %8 = vector.load %arg2[%c0_3, %c0_4] : memref<1x2xf32, #tpu.memory_space<vmem>>, vector<1x2xf32>
    %9 = vector.broadcast %8 : vector<1x2xf32> to vector<2x2xf32>
    %10 = arith.addf %7, %9 : vector<2x2xf32>
    %cst_5 = arith.constant dense<0xFF800000> : vector<2xf32>
    %11 = vector.multi_reduction <maximumf>, %10, %cst_5 [1] : vector<2x2xf32> to vector<2xf32>
    %12 = vector.shape_cast %11 : vector<2xf32> to vector<2x1xf32>
    %13 = vector.broadcast %12 : vector<2x1xf32> to vector<2x2xf32>
    %14 = arith.subf %10, %13 : vector<2x2xf32>
    %15 = math.exp %14 : vector<2x2xf32>
    %cst_6 = arith.constant dense<0.000000e+00> : vector<2xf32>
    %16 = vector.multi_reduction <add>, %15, %cst_6 [1] : vector<2x2xf32> to vector<2xf32>
    %17 = vector.shape_cast %16 : vector<2xf32> to vector<2x1xf32>
    %18 = vector.broadcast %17 : vector<2x1xf32> to vector<2x2xf32>
    %19 = arith.divf %15, %18 : vector<2x2xf32>
    %c0_7 = arith.constant 0 : index
    %c0_8 = arith.constant 0 : index
    %20 = vector.load %arg3[%c0_7, %c0_8] : memref<2x2xf32, #tpu.memory_space<vmem>>, vector<2x2xf32>
    tpu.vector_store %arg3[%c0_7, %c0_8], %19 {strides = array<i32>} : memref<2x2xf32, #tpu.memory_space<vmem>>, vector<2x2xf32>,
    return
  }
}

</mosaic_0001>

<llo_original>
// kernel: policy_head.1
$region0: #{policy_head.1}
  #allocation0 [shape = 'u32[]', space=smem, size = 0x4, offset = 0x4, fixed_abs, tag = 'smem constant byte address 0x4 - core index']
  #allocation1 [shape = 'u32[144,128]{1,0:T(1,128)}', space=vmem, size = 0x12000, scoped, tag = 'internal scratch']
  %s0 = inlined_call_operand.vmem [shape: f32[2,3200], index: 0, kind: input, shape index: {}]
  %s1 = inlined_call_operand.vmem [shape: f32[2,3200], index: 1, kind: input, shape index: {}]
  %s2 = inlined_call_operand.vmem [shape: f32[1,2], index: 2, kind: input, shape index: {}]
  %s3 = inlined_call_operand.hbm [shape: f32[2,2], index: 3, kind: output, shape index: {}]
  %s4 = sld [smem:[#allocation0]]
  $region22: #{policy_head.1} parent=0
    _
  %s6 = ssub.s32 1, %s4
  %s7 = scalar_select 0, %s6, %s4
  $region1: #{policy_head.1} parent=0
    #allocation2 [shape = 'u8[1024]{0}', space=vmem, size = 0x400, scoped, tag = 'output window, operand 0, single buffered']
    #allocation3 [shape = 's32[1]{0}', space=sflag, size = 0x4, scoped, tag = 'scoped memory for policy_head.1']
    %8 = vsyncpa [#allocation3], 0
    // Predicated region
    $region2: #{policy_head.1} parent=1 // pred_check
      _
    $region3: #{policy_head.1} parent=1 // pred_check_branch
      %10 = sbr.rel (0) target = $region5
    $region4: #{policy_head.1} parent=1 // pred_region
      _
    $region5: #{policy_head.1} parent=1 // pred_fallthru
      _
    // Predicated region
    $region6: #{policy_head.1} parent=1 // pred_check
      _
    $region7: #{policy_head.1} parent=1 // pred_check_branch
      %12 = sbr.rel (0) target = $region9
    $region8: #{policy_head.1} parent=1 // pred_region
      _
    $region9: #{policy_head.1} parent=1 // pred_fallthru
      _
    // Predicated region
    $region10: #{policy_head.1} parent=1 // pred_check
      _
    $region11: #{policy_head.1} parent=1 // pred_check_branch
      %14 = sbr.rel (0) target = $region13
    $region12: #{policy_head.1} parent=1 // pred_region
      _
    $region13: #{policy_head.1} parent=1 // pred_fallthru
      _
    %v15 = vld [vmem:[%s0] sm:$0xff]
    %v16 = vld [vmem:[%s0 + $0x8] sm:$0xff]
    %v17 = vld [vmem:[%s0 + $0x10] sm:$0xff]
    %v18 = vld [vmem:[%s0 + $0x18] sm:$0xff]
    %v19 = vld [vmem:[%s0 + $0x20] sm:$0xff]
    %v20 = vld [vmem:[%s0 + $0x28] sm:$0xff]
    %v21 = vld [vmem:[%s0 + $0x30] sm:$0x3]
    %v22 = vld [vmem:[%s1] sm:$0xff]
    %v23 = vld [vmem:[%s1 + $0x8] sm:$0xff]
    %v24 = vld [vmem:[%s1 + $0x10] sm:$0xff]
    %v25 = vld [vmem:[%s1 + $0x18] sm:$0xff]
    %v26 = vld [vmem:[%s1 + $0x20] sm:$0xff]
    %v27 = vld [vmem:[%s1 + $0x28] sm:$0xff]
    %v28 = vld [vmem:[%s1 + $0x30] sm:$0x3]
    %v37 = vunpack.c.l.s4 1966171168
    %v38 = vunpack.c.0.s8 %v37
    %v39 = vlaneseq
    %v40 = vshrl.u32 %v39, 7
    %v41 = vsub.s32 %v38, %v40
    %v42 = vrot.slane %v15, %v41
    %v44 = vunpack.c.l.s4 1966171168
    %v45 = vunpack.c.0.s8 %v44
    %v46 = vlaneseq
    %v47 = vshrl.u32 %v46, 7
    %v48 = vsub.s32 %v45, %v47
    %v49 = vrot.slane %v16, %v48
    %v50 = vcombine.low %v42, %v49
    %v51 = vcombine.high %v42, %v49
    %v53 = vunpack.c.l.s4 1966171168
    %v54 = vunpack.c.0.s8 %v53
    %v55 = vlaneseq
    %v56 = vshrl.u32 %v55, 7
    %v57 = vsub.s32 %v54, %v56
    %v58 = vrot.slane %v17, %v57
    %v60 = vunpack.c.l.s4 1966171168
    %v61 = vunpack.c.0.s8 %v60
    %v62 = vlaneseq
    %v63 = vshrl.u32 %v62, 7
    %v64 = vsub.s32 %v61, %v63
    %v65 = vrot.slane %v18, %v64
    %v66 = vcombine.low %v58, %v65
    %v67 = vcombine.high %v58, %v65
    %v69 = vunpack.c.l.s4 1966171168
    %v70 = vunpack.c.0.s8 %v69
    %v71 = vlaneseq
    %v72 = vshrl.u32 %v71, 7
    %v73 = vsub.s32 %v70, %v72
    %v74 = vrot.slane %v19, %v73
    %v76 = vunpack.c.l.s4 1966171168
    %v77 = vunpack.c.0.s8 %v76
    %v78 = vlaneseq
    %v79 = vshrl.u32 %v78, 7
    %v80 = vsub.s32 %v77, %v79
    %v81 = vrot.slane %v20, %v80
    %v82 = vcombine.low %v74, %v81
    %v83 = vcombine.high %v74, %v81
    %v85 = vunpack.c.l.s4 1966171168
    %v86 = vunpack.c.0.s8 %v85
    %v87 = vlaneseq
    %v88 = vshrl.u32 %v87, 7
    %v89 = vsub.s32 %v86, %v88
    %v90 = vrot.slane %v21, %v89
    %v91 = vcombine.high %v90, %v90
    %v92 = vlaneseq
    %v93 = vshrl.u32 %v92, 7
    %v94 = vsub.s32 0, %v93
    %v95 = vrot.slane %v50, %v94
    %v96 = vlaneseq
    %v97 = vshrl.u32 %v96, 7
    %v98 = vsub.s32 1, %v97
    %v99 = vrot.slane %v50, %v98
    %v100 = vlaneseq
    %v101 = vshrl.u32 %v100, 7
    %v102 = vsub.s32 2, %v101
    %v103 = vrot.slane %v50, %v102
    %v104 = vlaneseq
    %v105 = vshrl.u32 %v104, 7
    %v106 = vsub.s32 3, %v105
    %v107 = vrot.slane %v50, %v106
    %v108 = vlaneseq
    %v109 = vshrl.u32 %v108, 7
    %v110 = vsub.s32 4, %v109
    %v111 = vrot.slane %v50, %v110
    %v112 = vlaneseq
    %v113 = vshrl.u32 %v112, 7
    %v114 = vsub.s32 5, %v113
    %v115 = vrot.slane %v50, %v114
    %v116 = vlaneseq
    %v117 = vshrl.u32 %v116, 7
    %v118 = vsub.s32 6, %v117
    %v119 = vrot.slane %v50, %v118
    %v120 = vlaneseq
    %v121 = vshrl.u32 %v120, 7
    %v122 = vsub.s32 7, %v121
    %v123 = vrot.slane %v50, %v122
    %v124 = vlaneseq
    %v125 = vshrl.u32 %v124, 7
    %v126 = vsub.s32 0, %v125
    %v127 = vrot.slane %v66, %v126
    %v128 = vlaneseq
    %v129 = vshrl.u32 %v128, 7
    %v130 = vsub.s32 1, %v129
    %v131 = vrot.slane %v66, %v130
    %v132 = vlaneseq
    %v133 = vshrl.u32 %v132, 7
    %v134 = vsub.s32 2, %v133
    %v135 = vrot.slane %v66, %v134
    %v136 = vlaneseq
    %v137 = vshrl.u32 %v136, 7
    %v138 = vsub.s32 3, %v137
    %v139 = vrot.slane %v66, %v138
    %v140 = vlaneseq
    %v141 = vshrl.u32 %v140, 7
    %v142 = vsub.s32 4, %v141
    %v143 = vrot.slane %v66, %v142
    %v144 = vlaneseq
    %v145 = vshrl.u32 %v144, 7
    %v146 = vsub.s32 5, %v145
    %v147 = vrot.slane %v66, %v146
    %v148 = vlaneseq
    %v149 = vshrl.u32 %v148, 7
    %v150 = vsub.s32 6, %v149
    %v151 = vrot.slane %v66, %v150
    %v152 = vlaneseq
    %v153 = vshrl.u32 %v152, 7
    %v154 = vsub.s32 7, %v153
    %v155 = vrot.slane %v66, %v154
    %v156 = vlaneseq
    %v157 = vshrl.u32 %v156, 7
    %v158 = vsub.s32 0, %v157
    %v159 = vrot.slane %v82, %v158
    %v160 = vlaneseq
    %v161 = vshrl.u32 %v160, 7
    %v162 = vsub.s32 1, %v161
    %v163 = vrot.slane %v82, %v162
    %v164 = vlaneseq
    %v165 = vshrl.u32 %v164, 7
    %v166 = vsub.s32 2, %v165
    %v167 = vrot.slane %v82, %v166
    %v168 = vlaneseq
    %v169 = vshrl.u32 %v168, 7
    %v170 = vsub.s32 3, %v169
    %v171 = vrot.slane %v82, %v170
    %v172 = vlaneseq
    %v173 = vshrl.u32 %v172, 7
    %v174 = vsub.s32 4, %v173
    %v175 = vrot.slane %v82, %v174
    %v176 = vlaneseq
    %v177 = vshrl.u32 %v176, 7
    %v178 = vsub.s32 5, %v177
    %v179 = vrot.slane %v82, %v178
    %v180 = vlaneseq
    %v181 = vshrl.u32 %v180, 7
    %v182 = vsub.s32 6, %v181
    %v183 = vrot.slane %v82, %v182
    %v184 = vlaneseq
    %v185 = vshrl.u32 %v184, 7
    %v186 = vsub.s32 7, %v185
    %v187 = vrot.slane %v82, %v186
    %v188 = vlaneseq
    %v189 = vshrl.u32 %v188, 7
    %v190 = vsub.s32 0, %v189
    %v191 = vrot.slane %v90, %v190
    %v192 = vlaneseq
    %v193 = vshrl.u32 %v192, 7
    %v194 = vsub.s32 0, %v193
    %v195 = vrot.slane %v51, %v194
    %v196 = vlaneseq
    %v197 = vshrl.u32 %v196, 7
    %v198 = vsub.s32 1, %v197
    %v199 = vrot.slane %v51, %v198
    %v200 = vlaneseq
    %v201 = vshrl.u32 %v200, 7
    %v202 = vsub.s32 2, %v201
    %v203 = vrot.slane %v51, %v202
    %v204 = vlaneseq
    %v205 = vshrl.u32 %v204, 7
    %v206 = vsub.s32 3, %v205
    %v207 = vrot.slane %v51, %v206
    %v208 = vlaneseq
    %v209 = vshrl.u32 %v208, 7
    %v210 = vsub.s32 4, %v209
    %v211 = vrot.slane %v51, %v210
    %v212 = vlaneseq
    %v213 = vshrl.u32 %v212, 7
    %v214 = vsub.s32 5, %v213
    %v215 = vrot.slane %v51, %v214
    %v216 = vlaneseq
    %v217 = vshrl.u32 %v216, 7
    %v218 = vsub.s32 6, %v217
    %v219 = vrot.slane %v51, %v218
    %v220 = vlaneseq
    %v221 = vshrl.u32 %v220, 7
    %v222 = vsub.s32 7, %v221
    %v223 = vrot.slane %v51, %v222
    %v224 = vlaneseq
    %v225 = vshrl.u32 %v224, 7
    %v226 = vsub.s32 0, %v225
    %v227 = vrot.slane %v67, %v226
    %v228 = vlaneseq
    %v229 = vshrl.u32 %v228, 7
    %v230 = vsub.s32 1, %v229
    %v231 = vrot.slane %v67, %v230
    %v232 = vlaneseq
    %v233 = vshrl.u32 %v232, 7
    %v234 = vsub.s32 2, %v233
    %v235 = vrot.slane %v67, %v234
    %v236 = vlaneseq
    %v237 = vshrl.u32 %v236, 7
    %v238 = vsub.s32 3, %v237
    %v239 = vrot.slane %v67, %v238
    %v240 = vlaneseq
    %v241 = vshrl.u32 %v240, 7
    %v242 = vsub.s32 4, %v241
    %v243 = vrot.slane %v67, %v242
    %v244 = vlaneseq
    %v245 = vshrl.u32 %v244, 7
    %v246 = vsub.s32 5, %v245
    %v247 = vrot.slane %v67, %v246
    %v248 = vlaneseq
    %v249 = vshrl.u32 %v248, 7
    %v250 = vsub.s32 6, %v249
    %v251 = vrot.slane %v67, %v250
    %v252 = vlaneseq
    %v253 = vshrl.u32 %v252, 7
    %v254 = vsub.s32 7, %v253
    %v255 = vrot.slane %v67, %v254
    %v256 = vlaneseq
    %v257 = vshrl.u32 %v256, 7
    %v258 = vsub.s32 0, %v257
    %v259 = vrot.slane %v83, %v258
    %v260 = vlaneseq
    %v261 = vshrl.u32 %v260, 7
    %v262 = vsub.s32 1, %v261
    %v263 = vrot.slane %v83, %v262
    %v264 = vlaneseq
    %v265 = vshrl.u32 %v264, 7
    %v266 = vsub.s32 2, %v265
    %v267 = vrot.slane %v83, %v266
    %v268 = vlaneseq
    %v269 = vshrl.u32 %v268, 7
    %v270 = vsub.s32 3, %v269
    %v271 = vrot.slane %v83, %v270
    %v272 = vlaneseq
    %v273 = vshrl.u32 %v272, 7
    %v274 = vsub.s32 4, %v273
    %v275 = vrot.slane %v83, %v274
    %v276 = vlaneseq
    %v277 = vshrl.u32 %v276, 7
    %v278 = vsub.s32 5, %v277
    %v279 = vrot.slane %v83, %v278
    %v280 = vlaneseq
    %v281 = vshrl.u32 %v280, 7
    %v282 = vsub.s32 6, %v281
    %v283 = vrot.slane %v83, %v282
    %v284 = vlaneseq
    %v285 = vshrl.u32 %v284, 7
    %v286 = vsub.s32 7, %v285
    %v287 = vrot.slane %v83, %v286
    %v288 = vlaneseq
    %v289 = vshrl.u32 %v288, 7
    %v290 = vsub.s32 0, %v289
    %v291 = vrot.slane %v91, %v290
    %v349 = vcombine.high %v22, %v22
    %v351 = vunpack.c.l.s4 1983009808
    %v352 = vunpack.c.0.s8 %v351
    %v353 = vlaneseq
    %v354 = vshrl.u32 %v353, 7
    %v355 = vsub.s32 %v352, %v354
    %v356 = vrot.slane %v22, %v355
    %v358 = vunpack.c.l.s4 1983009808
    %v359 = vunpack.c.0.s8 %v358
    %v360 = vlaneseq
    %v361 = vshrl.u32 %v360, 7
    %v362 = vsub.s32 %v359, %v361
    %v363 = vrot.slane %v349, %v362
    %v364 = vcombine.high %v356, %v356
    %v365 = vcombine.high %v363, %v363
    %v366 = vcombine.high %v23, %v23
    %v368 = vunpack.c.l.s4 1983009808
    %v369 = vunpack.c.0.s8 %v368
    %v370 = vlaneseq
    %v371 = vshrl.u32 %v370, 7
    %v372 = vsub.s32 %v369, %v371
    %v373 = vrot.slane %v23, %v372
    %v375 = vunpack.c.l.s4 1983009808
    %v376 = vunpack.c.0.s8 %v375
    %v377 = vlaneseq
    %v378 = vshrl.u32 %v377, 7
    %v379 = vsub.s32 %v376, %v378
    %v380 = vrot.slane %v366, %v379
    %v381 = vcombine.high %v373, %v373
    %v382 = vcombine.high %v380, %v380
    %v383 = vcombine.high %v24, %v24
    %v385 = vunpack.c.l.s4 1983009808
    %v386 = vunpack.c.0.s8 %v385
    %v387 = vlaneseq
    %v388 = vshrl.u32 %v387, 7
    %v389 = vsub.s32 %v386, %v388
    %v390 = vrot.slane %v24, %v389
    %v392 = vunpack.c.l.s4 1983009808
    %v393 = vunpack.c.0.s8 %v392
    %v394 = vlaneseq
    %v395 = vshrl.u32 %v394, 7
    %v396 = vsub.s32 %v393, %v395
    %v397 = vrot.slane %v383, %v396
    %v398 = vcombine.high %v390, %v390
    %v399 = vcombine.high %v397, %v397
    %v400 = vcombine.high %v25, %v25
    %v402 = vunpack.c.l.s4 1983009808
    %v403 = vunpack.c.0.s8 %v402
    %v404 = vlaneseq
    %v405 = vshrl.u32 %v404, 7
    %v406 = vsub.s32 %v403, %v405
    %v407 = vrot.slane %v25, %v406
    %v409 = vunpack.c.l.s4 1983009808
    %v410 = vunpack.c.0.s8 %v409
    %v411 = vlaneseq
    %v412 = vshrl.u32 %v411, 7
    %v413 = vsub.s32 %v410, %v412
    %v414 = vrot.slane %v400, %v413
    %v415 = vcombine.high %v407, %v407
    %v416 = vcombine.high %v414, %v414
    %v417 = vcombine.high %v26, %v26
    %v419 = vunpack.c.l.s4 1983009808
    %v420 = vunpack.c.0.s8 %v419
    %v421 = vlaneseq
    %v422 = vshrl.u32 %v421, 7
    %v423 = vsub.s32 %v420, %v422
    %v424 = vrot.slane %v26, %v423
    %v426 = vunpack.c.l.s4 1983009808
    %v427 = vunpack.c.0.s8 %v426
    %v428 = vlaneseq
    %v429 = vshrl.u32 %v428, 7
    %v430 = vsub.s32 %v427, %v429
    %v431 = vrot.slane %v417, %v430
    %v432 = vcombine.high %v424, %v424
    %v433 = vcombine.high %v431, %v431
    %v434 = vcombine.high %v27, %v27
    %v436 = vunpack.c.l.s4 1983009808
    %v437 = vunpack.c.0.s8 %v436
    %v438 = vlaneseq
    %v439 = vshrl.u32 %v438, 7
    %v440 = vsub.s32 %v437, %v439
    %v441 = vrot.slane %v27, %v440
    %v443 = vunpack.c.l.s4 1983009808
    %v444 = vunpack.c.0.s8 %v443
    %v445 = vlaneseq
    %v446 = vshrl.u32 %v445, 7
    %v447 = vsub.s32 %v444, %v446
    %v448 = vrot.slane %v434, %v447
    %v449 = vcombine.high %v441, %v441
    %v450 = vcombine.high %v448, %v448
    %v452 = vunpack.c.l.s4 1983009808
    %v453 = vunpack.c.0.s8 %v452
    %v454 = vlaneseq
    %v455 = vshrl.u32 %v454, 7
    %v456 = vsub.s32 %v453, %v455
    %v457 = vrot.slane %v28, %v456
    %v483 = vmul.f32 %v95, %v356
    %v484 = vmul.f32 %v99, %v364
    %v485 = vmul.f32 %v103, %v363
    %v486 = vmul.f32 %v107, %v365
    %v487 = vmul.f32 %v111, %v373
    %v488 = vmul.f32 %v115, %v381
    %v489 = vmul.f32 %v119, %v380
    %v490 = vmul.f32 %v123, %v382
    %v491 = vmul.f32 %v127, %v390
    %v492 = vmul.f32 %v131, %v398
    %v493 = vmul.f32 %v135, %v397
    %v494 = vmul.f32 %v139, %v399
    %v495 = vmul.f32 %v143, %v407
    %v496 = vmul.f32 %v147, %v415
    %v497 = vmul.f32 %v151, %v414
    %v498 = vmul.f32 %v155, %v416
    %v499 = vmul.f32 %v159, %v424
    %v500 = vmul.f32 %v163, %v432
    %v501 = vmul.f32 %v167, %v431
    %v502 = vmul.f32 %v171, %v433
    %v503 = vmul.f32 %v175, %v441
    %v504 = vmul.f32 %v179, %v449
    %v505 = vmul.f32 %v183, %v448
    %v506 = vmul.f32 %v187, %v450
    %v507 = vmul.f32 %v191, %v457
    %v508 = vmul.f32 %v195, %v356
    %v509 = vmul.f32 %v199, %v364
    %v510 = vmul.f32 %v203, %v363
    %v511 = vmul.f32 %v207, %v365
    %v512 = vmul.f32 %v211, %v373
    %v513 = vmul.f32 %v215, %v381
    %v514 = vmul.f32 %v219, %v380
    %v515 = vmul.f32 %v223, %v382
    %v516 = vmul.f32 %v227, %v390
    %v517 = vmul.f32 %v231, %v398
    %v518 = vmul.f32 %v235, %v397
    %v519 = vmul.f32 %v239, %v399
    %v520 = vmul.f32 %v243, %v407
    %v521 = vmul.f32 %v247, %v415
    %v522 = vmul.f32 %v251, %v414
    %v523 = vmul.f32 %v255, %v416
    %v524 = vmul.f32 %v259, %v424
    %v525 = vmul.f32 %v263, %v432
    %v526 = vmul.f32 %v267, %v431
    %v527 = vmul.f32 %v271, %v433
    %v528 = vmul.f32 %v275, %v441
    %v529 = vmul.f32 %v279, %v449
    %v530 = vmul.f32 %v283, %v448
    %v531 = vmul.f32 %v287, %v450
    %v532 = vmul.f32 %v291, %v457
    %vm533 = vcmask 1041408
    %v534 = vsel %vm533, %v483, 0.0
    %v535 = vsel %vm533, %v484, 0.0
    %v536 = vadd.f32 %v534, %v535
    %v537 = vsel %vm533, %v485, 0.0
    %v538 = vadd.f32 %v536, %v537
    %v539 = vsel %vm533, %v486, 0.0
    %v540 = vadd.f32 %v538, %v539
    %v541 = vsel %vm533, %v487, 0.0
    %v542 = vadd.f32 %v540, %v541
    %v543 = vsel %vm533, %v488, 0.0
    %v544 = vadd.f32 %v542, %v543
    %v545 = vsel %vm533, %v489, 0.0
    %v546 = vadd.f32 %v544, %v545
    %v547 = vsel %vm533, %v490, 0.0
    %v548 = vadd.f32 %v546, %v547
    %v549 = vsel %vm533, %v491, 0.0
    %v550 = vadd.f32 %v548, %v549
    %v551 = vsel %vm533, %v492, 0.0
    %v552 = vadd.f32 %v550, %v551
    %v553 = vsel %vm533, %v493, 0.0
    %v554 = vadd.f32 %v552, %v553
    %v555 = vsel %vm533, %v494, 0.0
    %v556 = vadd.f32 %v554, %v555
    %v557 = vsel %vm533, %v495, 0.0
    %v558 = vadd.f32 %v556, %v557
    %v559 = vsel %vm533, %v496, 0.0
    %v560 = vadd.f32 %v558, %v559
    %v561 = vsel %vm533, %v497, 0.0
    %v562 = vadd.f32 %v560, %v561
    %v563 = vsel %vm533, %v498, 0.0
    %v564 = vadd.f32 %v562, %v563
    %v565 = vsel %vm533, %v499, 0.0
    %v566 = vadd.f32 %v564, %v565
    %v567 = vsel %vm533, %v500, 0.0
    %v568 = vadd.f32 %v566, %v567
    %v569 = vsel %vm533, %v501, 0.0
    %v570 = vadd.f32 %v568, %v569
    %v571 = vsel %vm533, %v502, 0.0
    %v572 = vadd.f32 %v570, %v571
    %v573 = vsel %vm533, %v503, 0.0
    %v574 = vadd.f32 %v572, %v573
    %v575 = vsel %vm533, %v504, 0.0
    %v576 = vadd.f32 %v574, %v575
    %v577 = vsel %vm533, %v505, 0.0
    %v578 = vadd.f32 %v576, %v577
    %v579 = vsel %vm533, %v506, 0.0
    %v580 = vadd.f32 %v578, %v579
    %v581 = vsel %vm533, %v507, 0.0
    %v582 = vadd.f32 %v580, %v581
    %583 = vadd.xlane.f32.xlu0 %v582
    %v584 = vpop.xlane.xlu0 %583
    %v585 = vsel %vm533, %v508, 0.0
    %v586 = vsel %vm533, %v509, 0.0
    %v587 = vadd.f32 %v585, %v586
    %v588 = vsel %vm533, %v510, 0.0
    %v589 = vadd.f32 %v587, %v588
    %v590 = vsel %vm533, %v511, 0.0
    %v591 = vadd.f32 %v589, %v590
    %v592 = vsel %vm533, %v512, 0.0
    %v593 = vadd.f32 %v591, %v592
    %v594 = vsel %vm533, %v513, 0.0
    %v595 = vadd.f32 %v593, %v594
    %v596 = vsel %vm533, %v514, 0.0
    %v597 = vadd.f32 %v595, %v596
    %v598 = vsel %vm533, %v515, 0.0
    %v599 = vadd.f32 %v597, %v598
    %v600 = vsel %vm533, %v516, 0.0
    %v601 = vadd.f32 %v599, %v600
    %v602 = vsel %vm533, %v517, 0.0
    %v603 = vadd.f32 %v601, %v602
    %v604 = vsel %vm533, %v518, 0.0
    %v605 = vadd.f32 %v603, %v604
    %v606 = vsel %vm533, %v519, 0.0
    %v607 = vadd.f32 %v605, %v606
    %v608 = vsel %vm533, %v520, 0.0
    %v609 = vadd.f32 %v607, %v608
    %v610 = vsel %vm533, %v521, 0.0
    %v611 = vadd.f32 %v609, %v610
    %v612 = vsel %vm533, %v522, 0.0
    %v613 = vadd.f32 %v611, %v612
    %v614 = vsel %vm533, %v523, 0.0
    %v615 = vadd.f32 %v613, %v614
    %v616 = vsel %vm533, %v524, 0.0
    %v617 = vadd.f32 %v615, %v616
    %v618 = vsel %vm533, %v525, 0.0
    %v619 = vadd.f32 %v617, %v618
    %v620 = vsel %vm533, %v526, 0.0
    %v621 = vadd.f32 %v619, %v620
    %v622 = vsel %vm533, %v527, 0.0
    %v623 = vadd.f32 %v621, %v622
    %v624 = vsel %vm533, %v528, 0.0
    %v625 = vadd.f32 %v623, %v624
    %v626 = vsel %vm533, %v529, 0.0
    %v627 = vadd.f32 %v625, %v626
    %v628 = vsel %vm533, %v530, 0.0
    %v629 = vadd.f32 %v627, %v628
    %v630 = vsel %vm533, %v531, 0.0
    %v631 = vadd.f32 %v629, %v630
    %v632 = vsel %vm533, %v532, 0.0
    %v633 = vadd.f32 %v631, %v632
    %634 = vadd.xlane.f32.xlu0 %v633
    %v635 = vpop.xlane.xlu0 %634
    %v636 = vld [vmem:[%s2] sm:$0x1]
    %v638 = vlaneseq
    %v639 = vshrl.u32 %v638, 7
    %v640 = vsub.s32 0, %v639
    %v641 = vrot.slane %v636, %v640
    %643 = vbcast.lane.b32.xlu0 %v641, 256
    %v644 = vpop.permute.xlu0 %643
    %v646 = vadd.f32 %v584, %v644
    %v647 = vadd.f32 %v635, %v644
    %650 = vset.pattern.permute.xlu0 0
    %651 = vperm.xlu0 %650, %v646
    %v652 = vpop.permute.xlu0 %651
    %653 = vset.pattern.permute.xlu0 0
    %654 = vperm.xlu0 %653, %v647
    %v655 = vpop.permute.xlu0 %654
    %v656 = vlaneseq
    %v657 = vand.u32 %v656, 127
    %v658 = vlaneseq
    %v659 = vshrl.u32 %v658, 7
    %v660 = vsub.s32 %v657, %v659
    %v661 = vrot.slane %v652, %v660
    %v662 = vlaneseq
    %v663 = vshrl.u32 %v662, 7
    %v664 = vsub.s32 %v657, %v663
    %v665 = vrot.slane %v655, %v664
    %vm666 = vcmask 1041409
    %v667 = vsel %vm666, %v665, %v661
    %vm669 = vcmask 9216
    %v670 = vsel %vm669, %v667, -inf
    %671 = vmax.xlane.f32.xlu0 %v670
    %v672 = vpop.xlane.xlu0 %671
    %v674 = vlaneseq
    %v675 = vshrl.u32 %v674, 7
    %v676 = vsub.s32 0, %v675
    %v677 = vrot.slane %v672, %v676
    %v678 = vlaneseq
    %v679 = vshrl.u32 %v678, 7
    %v680 = vsub.s32 1, %v679
    %v681 = vrot.slane %v672, %v680
    %v684 = vsub.f32 %v646, %v677
    %v685 = vsub.f32 %v647, %v681
    %v686 = vmul.f32 %v684, 1.442695
    %v687 = vpow.pop %v686
    %v688 = vmul.f32 %v685, 1.442695
    %v689 = vpow.pop %v688
    %692 = vset.pattern.permute.xlu0 0
    %693 = vperm.xlu0 %692, %v687
    %v694 = vpop.permute.xlu0 %693
    %695 = vset.pattern.permute.xlu0 0
    %696 = vperm.xlu0 %695, %v689
    %v697 = vpop.permute.xlu0 %696
    %v698 = vlaneseq
    %v699 = vshrl.u32 %v698, 7
    %v700 = vsub.s32 %v657, %v699
    %v701 = vrot.slane %v694, %v700
    %v702 = vlaneseq
    %v703 = vshrl.u32 %v702, 7
    %v704 = vsub.s32 %v657, %v703
    %v705 = vrot.slane %v697, %v704
    %v706 = vsel %vm666, %v705, %v701
    %v708 = vsel %vm669, %v706, 0.0
    %709 = vadd.xlane.f32.xlu0 %v708
    %v710 = vpop.xlane.xlu0 %709
    %v712 = vlaneseq
    %v713 = vshrl.u32 %v712, 7
    %v714 = vsub.s32 0, %v713
    %v715 = vrot.slane %v710, %v714
    %v716 = vlaneseq
    %v717 = vshrl.u32 %v716, 7
    %v718 = vsub.s32 1, %v717
    %v719 = vrot.slane %v710, %v718
    %v722 = vrcp.pop %v715
    %v723 = vmul.f32 %v687, %v722
    %v724 = vrcp.pop %v719
    %v725 = vmul.f32 %v689, %v724
    %728 = vset.pattern.permute.xlu0 0
    %729 = vperm.xlu0 %728, %v723
    %v730 = vpop.permute.xlu0 %729
    %731 = vset.pattern.permute.xlu0 0
    %732 = vperm.xlu0 %731, %v725
    %v733 = vpop.permute.xlu0 %732
    %v734 = vlaneseq
    %v735 = vshrl.u32 %v734, 7
    %v736 = vsub.s32 %v657, %v735
    %v737 = vrot.slane %v730, %v736
    %v738 = vlaneseq
    %v739 = vshrl.u32 %v738, 7
    %v740 = vsub.s32 %v657, %v739
    %v741 = vrot.slane %v733, %v740
    %v742 = vsel %vm666, %v741, %v737
    %744 = vst.msk [vmem:[#allocation2] sm:$0x3] %vm669, %v742
    // Predicated region
    $region14: #{policy_head.1} parent=1 // pred_check
      _
    $region15: #{policy_head.1} parent=1 // pred_check_branch
      %746 = sbr.rel (0) target = $region17
    $region16: #{policy_head.1} parent=1 // pred_region
      %s748 = ssub.s32 32, 32
      %749 = vsyncadd [#allocation3], %s748
      %s751 = sshll.u32 [#allocation2], 4
      %s752 = int_to_ptr.vmem [resolvable:$true] %s751
      %754 = dma.vmem_to_hbm [thread:$0]  %s752, 32, %s3, [#allocation3]
    $region17: #{policy_head.1} parent=1 // pred_fallthru
      _
    // Predicated region
    $region18: #{policy_head.1} parent=1 // pred_check
      _
    $region19: #{policy_head.1} parent=1 // pred_check_branch
      %756 = sbr.rel (0) target = $region21
    $region20: #{policy_head.1} parent=1 // pred_region
      %757 = dma.done [#allocation3], 32
    $region21: #{policy_head.1} parent=1 // pred_fallthru
      _
    %758 = vsyncpa [#allocation3], 1

</llo_original>
